<compile_context>
chip_gen: v5e
topology: v5e:2x2
jax: 0.10.0
libtpu: 0.0.40
codegen_flags: <defaults>
</compile_context>

<pallas_src>
import numpy as np
import jax
import jax.numpy as jnp
from jax.experimental import pallas as pl
from jax.experimental.pallas import tpu as pltpu

EPS = 1e-5
_LANE_CAP = 8192     # max lanes per grid step (keeps VMEM << scoped limit)
_P_MAX = 8           # max spatial packing factor for the kron'd weights


# ------------------------------ helpers -------------------------------------

def _pick_packing(hw):
    """Choose (p, L, tn): pack p spatial groups into the contraction dim,
    L = hw // p positions per group, tn = lane tile (multiple of 128 when
    possible) dividing L."""
    p = _P_MAX
    while p > 1 and hw % (p * 128) != 0:
        p //= 2
    if hw % p != 0:
        p = 1
    L = hw // p
    t = (min(_LANE_CAP, L) // 128) * 128
    while t >= 128:
        if L % t == 0:
            return p, L, t
        t -= 128
    # TODO(synk): pad/mask the spatial axis when H*W has no multiple-of-128
    # factor; this full-extent fallback is correct but uses masked stores.
    return p, L, L


def _pack_cols(cols):
    """Pack 1-D vectors into one (R, 1) f32 column array.  Each segment is
    padded to a multiple of 8 rows so every static slice starts
    sublane-aligned.  Returns (array, start offsets)."""
    segs, offs, off = [], [], 0
    for c in cols:
        c = c.reshape(-1, 1).astype(jnp.float32)
        n = c.shape[0]
        pad = (-n) % 8
        segs.append(c)
        if pad:
            segs.append(jnp.zeros((pad, 1), jnp.float32))
        offs.append(off)
        off += n + pad
    return jnp.concatenate(segs, axis=0), offs


# -------------------------------- wrapper ------------------------------------

def fc_forward(x_nchw, params):
    """Forward pass of FC.  x_nchw: (B, C, H, W), C == dims.
    Weights are in torch nn.Linear layout: w_i (out, in), b_i (out,)."""
    (w1, b1, w2, b2, w3, b3, w4, b4, gamma, beta) = params
    B, C, H, W = x_nchw.shape
    hidden = 3 * C
    HW = H * W
    M = B * HW

    p, L, tn = _pick_packing(HW)
    n_lane = L // tn
    Cp, hp = C * p, hidden * p

    # (B, C, H, W) -> (B, C*p, L): FREE row-major reshape (no HBM transpose).
    x_packed = x_nchw.reshape(B, Cp, L)

    # Kronecker (block-diagonal) weight packing; bf16 MXU operands.
    eye_p = jnp.eye(p, dtype=jnp.float32)
    w1p = jnp.kron(w1.astype(jnp.float32), eye_p).astype(jnp.bfloat16)
    w2p = jnp.kron(w2.astype(jnp.float32), eye_p).astype(jnp.bfloat16)
    w3p = jnp.kron(w3.astype(jnp.float32), eye_p).astype(jnp.bfloat16)
    w4p = jnp.kron(w4.astype(jnp.float32), eye_p).astype(jnp.bfloat16)
    b1p = jnp.repeat(b1.astype(jnp.float32), p)          # row = m*p + k
    b2p = jnp.repeat(b2.astype(jnp.float32), p)
    b3p = jnp.repeat(b3.astype(jnp.float32), p)
    b4p = jnp.repeat(b4.astype(jnp.float32), p)

    consts1, offs = _pack_cols([b1p, b2p, b3p, b4p])
    o1, o2, o3, o4 = offs

    def mlp_packed(x_tile, w1_ref, w2_ref, w3_ref, w4_ref, c_ref):
        """Four packed linears + ReLUs: bf16 MXU operands, f32 accumulate."""
        x = x_tile.astype(jnp.bfloat16)                                # (Cp, tn)
        h = jnp.dot(w1_ref[...], x, preferred_element_type=jnp.float32)
        h = jnp.maximum(h + c_ref[o1:o1 + hp, :], 0.0).astype(jnp.bfloat16)
        h = jnp.dot(w2_ref[...], h, preferred_element_type=jnp.float32)
        h = jnp.maximum(h + c_ref[o2:o2 + hp, :], 0.0).astype(jnp.bfloat16)
        h = jnp.dot(w3_ref[...], h, preferred_element_type=jnp.float32)
        h = jnp.maximum(h + c_ref[o3:o3 + hp, :], 0.0).astype(jnp.bfloat16)
        r = jnp.dot(w4_ref[...], h, preferred_element_type=jnp.float32)
        return jnp.maximum(r + c_ref[o4:o4 + Cp, :], 0.0)              # (Cp, tn) f32

    grid = (B, n_lane)
    x_spec = pl.BlockSpec((1, Cp, tn), lambda b, j: (b, 0, j))

    def _const(arr):
        shape = arr.shape
        return pl.BlockSpec(shape, lambda b, j: (0,) * len(shape))

    w_specs = [_const(w1p), _const(w2p), _const(w3p), _const(w4p)]

    # ----- Pass 1: lane-wide per-batch partial BN stats (no r writeback) -----
    def stats_kernel(x_ref, w1_ref, w2_ref, w3_ref, w4_ref, c_ref,
                     sum_ref, sq_ref):
        @pl.when(pl.program_id(1) == 0)
        def _():
            sum_ref[...] = jnp.zeros_like(sum_ref)
            sq_ref[...] = jnp.zeros_like(sq_ref)

        r = mlp_packed(x_ref[0], w1_ref, w2_ref, w3_ref, w4_ref, c_ref)
        sum_ref[0] += r                # pure VALU adds, lane-dense accumulator
        sq_ref[0] += r * r

    ch_sum, ch_sq = pl.pallas_call(
        stats_kernel,
        out_shape=(jax.ShapeDtypeStruct((B, Cp, tn), jnp.float32),
                   jax.ShapeDtypeStruct((B, Cp, tn), jnp.float32)),
        grid_spec=pltpu.PrefetchScalarGridSpec(
            num_scalar_prefetch=0,
            grid=grid,
            in_specs=[x_spec] + w_specs + [_const(consts1)],
            out_specs=[pl.BlockSpec((1, Cp, tn), lambda b, j: (b, 0, 0)),
                       pl.BlockSpec((1, Cp, tn), lambda b, j: (b, 0, 0))],
        ),
        compiler_params=pltpu.CompilerParams(
            dimension_semantics=("parallel", "arbitrary")),
    )(x_packed, w1p, w2p, w3p, w4p, consts1)

    # Tiny f32 glue: cross-lane/batch/packing reduction + fold BN to an affine.
    total = jnp.sum(ch_sum.reshape(B, C, p, tn), axis=(0, 2, 3))
    totalsq = jnp.sum(ch_sq.reshape(B, C, p, tn), axis=(0, 2, 3))
    mean = total / M
    # NOTE: single-pass E[r^2]-E[r]^2 (clamped); fine at these magnitudes.
    var = jnp.maximum(totalsq / M - mean * mean, 0.0)     # biased batch var
    scale = gamma.astype(jnp.float32) / jnp.sqrt(var + EPS)
    shift = beta.astype(jnp.float32) - mean * scale

    consts2, offs2 = _pack_cols([b1p, b2p, b3p, b4p,
                                 jnp.repeat(scale, p), jnp.repeat(shift, p)])
    o_sc, o_sh = offs2[4], offs2[5]

    # ----- Pass 2: recompute packed MLP + fused BN affine + final ReLU -----
    def apply_kernel(x_ref, w1_ref, w2_ref, w3_ref, w4_ref, c_ref, y_ref):
        r = mlp_packed(x_ref[0], w1_ref, w2_ref, w3_ref, w4_ref, c_ref)
        y = r * c_ref[o_sc:o_sc + Cp, :] + c_ref[o_sh:o_sh + Cp, :]
        y_ref[0] = jnp.maximum(y, 0.0).astype(y_ref.dtype)

    y_packed = pl.pallas_call(
        apply_kernel,
        out_shape=jax.ShapeDtypeStruct((B, Cp, L), x_nchw.dtype),
        grid_spec=pltpu.PrefetchScalarGridSpec(
            num_scalar_prefetch=0,
            grid=grid,
            in_specs=[x_spec] + w_specs + [_const(consts2)],
            out_specs=pl.BlockSpec((1, Cp, tn), lambda b, j: (b, 0, j)),
        ),
        compiler_params=pltpu.CompilerParams(
            dimension_semantics=("parallel", "parallel")),
    )(x_packed, w1p, w2p, w3p, w4p, consts2)

    # (B, C*p, L) -> (B, C, H, W): free reshape.  dropout=None -> Identity.
    return y_packed.reshape(B, C, H, W)


# --------------------------- pure-JAX reference -------------------------------

def fc_reference(x_nchw, params):
    (w1, b1, w2, b2, w3, b3, w4, b4, gamma, beta) = params
    xp = jnp.transpose(x_nchw, (0, 2, 3, 1))
    h = jax.nn.relu(xp @ w1.T + b1)
    h = jax.nn.relu(h @ w2.T + b2)
    h = jax.nn.relu(h @ w3.T + b3)
    r = jax.nn.relu(h @ w4.T + b4)                      # relu4 (NHWC view)
    mean = jnp.mean(r, axis=(0, 1, 2))
    var = jnp.mean((r - mean) ** 2, axis=(0, 1, 2))     # biased
    y = jax.nn.relu((r - mean) / jnp.sqrt(var + EPS) * gamma + beta)
    return jnp.transpose(y, (0, 3, 1, 2))


# ---------------------------------- main --------------------------------------

if __name__ == "__main__":
    B, C, H, W = 2, 4, 16, 16     # dims = 4, hidden = 12
    hidden = 3 * C

    key = jax.random.PRNGKey(0)
    ks = jax.random.split(key, 11)
    x = jax.random.normal(ks[0], (B, C, H, W), dtype=jnp.float32)

    # Deterministic synthetic parameters in torch nn.Linear layout: w (out, in).
    w1 = 0.3 * jax.random.normal(ks[1], (hidden, C), dtype=jnp.float32)
    b1 = 0.1 * jax.random.normal(ks[2], (hidden,), dtype=jnp.float32)
    w2 = 0.3 * jax.random.normal(ks[3], (hidden, hidden), dtype=jnp.float32)
    b2 = 0.1 * jax.random.normal(ks[4], (hidden,), dtype=jnp.float32)
    w3 = 0.3 * jax.random.normal(ks[5], (hidden, hidden), dtype=jnp.float32)
    b3 = 0.1 * jax.random.normal(ks[6], (hidden,), dtype=jnp.float32)
    w4 = 0.3 * jax.random.normal(ks[7], (C, hidden), dtype=jnp.float32)
    b4 = 0.1 * jax.random.normal(ks[8], (C,), dtype=jnp.float32)
    gamma = 1.0 + 0.1 * jax.random.normal(ks[9], (C,), dtype=jnp.float32)
    beta = 0.1 * jax.random.normal(ks[10], (C,), dtype=jnp.float32)

    params = (w1, b1, w2, b2, w3, b3, w4, b4, gamma, beta)

    y = jax.block_until_ready(jax.jit(fc_forward)(x, params))
    y_ref = jax.block_until_ready(fc_reference(x, params))

    # bf16 MXU operands in the kernel -> looser tolerance vs. the f32 reference
    # (BN stats and the final affine stay in f32).
    np.testing.assert_allclose(np.asarray(y), np.asarray(y_ref),
                               rtol=6e-2, atol=6e-2)
    assert y.shape == (B, C, H, W)
    print("KERNEL_OK")
</pallas_src>

<mosaic_0001>
module attributes {stable_mosaic.version = 11 : i64} {
  func.func @stats_kernel(%arg0: i32, %arg1: i32, %arg2: memref<1x8x128xf32, #tpu.memory_space<vmem>>, %arg3: memref<24x8xbf16, #tpu.memory_space<vmem>>, %arg4: memref<24x24xbf16, #tpu.memory_space<vmem>>, %arg5: memref<24x24xbf16, #tpu.memory_space<vmem>>, %arg6: memref<8x24xbf16, #tpu.memory_space<vmem>>, %arg7: memref<80x1xf32, #tpu.memory_space<vmem>>, %arg8: memref<1x8x128xf32, #tpu.memory_space<vmem>>, %arg9: memref<1x8x128xf32, #tpu.memory_space<vmem>>) attributes {dimension_semantics = [#tpu.dimension_semantics<parallel>, #tpu.dimension_semantics<arbitrary>], iteration_bounds = array<i64: 2, 1>, scalar_prefetch = 0 : i64, scratch_operands = 0 : i64, tpu.core_type = #tpu.core_type<tc>, window_params = [{transform_indices = @transform_0, window_bounds = array<i64: 1, 8, 128>}, {pipeline_mode = #tpu.pipeline_mode<synchronous>, transform_indices = @transform_1, window_bounds = array<i64: 24, 8>}, {pipeline_mode = #tpu.pipeline_mode<synchronous>, transform_indices = @transform_2, window_bounds = array<i64: 24, 24>}, {pipeline_mode = #tpu.pipeline_mode<synchronous>, transform_indices = @transform_3, window_bounds = array<i64: 24, 24>}, {pipeline_mode = #tpu.pipeline_mode<synchronous>, transform_indices = @transform_4, window_bounds = array<i64: 8, 24>}, {pipeline_mode = #tpu.pipeline_mode<synchronous>, transform_indices = @transform_5, window_bounds = array<i64: 80, 1>}, {transform_indices = @transform_6, window_bounds = array<i64: 1, 8, 128>}, {transform_indices = @transform_7, window_bounds = array<i64: 1, 8, 128>}]} {
    %c0_i32 = arith.constant 0 : i32
    %0 = arith.cmpi eq, %arg1, %c0_i32 : i32
    %1 = arith.extui %0 : i1 to i32
    %c0_i32_0 = arith.constant 0 : i32
    %2 = arith.cmpi ne, %1, %c0_i32_0 : i32
    scf.if %2 {
      %cst_35 = arith.constant 0.000000e+00 : f32
      %50 = vector.broadcast %cst_35 : f32 to vector<1x8x128xf32>
      %c0_36 = arith.constant 0 : index
      %c0_37 = arith.constant 0 : index
      %c0_38 = arith.constant 0 : index
      %51 = vector.load %arg8[%c0_36, %c0_37, %c0_38] : memref<1x8x128xf32, #tpu.memory_space<vmem>>, vector<1x8x128xf32>
      tpu.vector_store %arg8[%c0_36, %c0_37, %c0_38], %50 {strides = array<i32>} : memref<1x8x128xf32, #tpu.memory_space<vmem>>, vector<1x8x128xf32>,
      %cst_39 = arith.constant 0.000000e+00 : f32
      %52 = vector.broadcast %cst_39 : f32 to vector<1x8x128xf32>
      %c0_40 = arith.constant 0 : index
      %c0_41 = arith.constant 0 : index
      %c0_42 = arith.constant 0 : index
      %53 = vector.load %arg9[%c0_40, %c0_41, %c0_42] : memref<1x8x128xf32, #tpu.memory_space<vmem>>, vector<1x8x128xf32>
      tpu.vector_store %arg9[%c0_40, %c0_41, %c0_42], %52 {strides = array<i32>} : memref<1x8x128xf32, #tpu.memory_space<vmem>>, vector<1x8x128xf32>,
    } else {
    }
    %c0 = arith.constant 0 : index
    %c0_1 = arith.constant 0 : index
    %c0_2 = arith.constant 0 : index
    %3 = vector.load %arg2[%c0, %c0_1, %c0_2] : memref<1x8x128xf32, #tpu.memory_space<vmem>>, vector<1x8x128xf32>
    %4 = vector.shape_cast %3 : vector<1x8x128xf32> to vector<8x128xf32>
    %5 = arith.truncf %4 : vector<8x128xf32> to vector<8x128xbf16>
    %c0_3 = arith.constant 0 : index
    %c0_4 = arith.constant 0 : index
    %6 = vector.load %arg3[%c0_3, %c0_4] : memref<24x8xbf16, #tpu.memory_space<vmem>>, vector<24x8xbf16>
    %cst = arith.constant dense<0.000000e+00> : vector<24x128xf32>
    %7 = tpu.matmul %6, %5, %cst {dimension_numbers = #tpu.dot_dimension_numbers<[1], [0], [0], [1], [0, 0, 1, 1], [], []>} : vector<24x8xbf16>, vector<8x128xbf16>, vector<24x128xf32> -> vector<24x128xf32>
    %c0_5 = arith.constant 0 : index
    %c0_6 = arith.constant 0 : index
    %8 = vector.load %arg7[%c0_5, %c0_6] : memref<80x1xf32, #tpu.memory_space<vmem>>, vector<24x1xf32>
    %9 = vector.broadcast %8 : vector<24x1xf32> to vector<24x128xf32>
    %10 = arith.addf %7, %9 : vector<24x128xf32>
    %cst_7 = arith.constant 0.000000e+00 : f32
    %11 = vector.broadcast %cst_7 : f32 to vector<24x128xf32>
    %12 = arith.maximumf %10, %11 : vector<24x128xf32>
    %13 = arith.truncf %12 : vector<24x128xf32> to vector<24x128xbf16>
    %c0_8 = arith.constant 0 : index
    %c0_9 = arith.constant 0 : index
    %14 = vector.load %arg4[%c0_8, %c0_9] : memref<24x24xbf16, #tpu.memory_space<vmem>>, vector<24x24xbf16>
    %cst_10 = arith.constant dense<0.000000e+00> : vector<24x128xf32>
    %15 = tpu.matmul %14, %13, %cst_10 {dimension_numbers = #tpu.dot_dimension_numbers<[1], [0], [0], [1], [0, 0, 1, 1], [], []>} : vector<24x24xbf16>, vector<24x128xbf16>, vector<24x128xf32> -> vector<24x128xf32>
    %c24 = arith.constant 24 : index
    %c0_11 = arith.constant 0 : index
    %16 = vector.load %arg7[%c24, %c0_11] : memref<80x1xf32, #tpu.memory_space<vmem>>, vector<24x1xf32>
    %17 = vector.broadcast %16 : vector<24x1xf32> to vector<24x128xf32>
    %18 = arith.addf %15, %17 : vector<24x128xf32>
    %cst_12 = arith.constant 0.000000e+00 : f32
    %19 = vector.broadcast %cst_12 : f32 to vector<24x128xf32>
    %20 = arith.maximumf %18, %19 : vector<24x128xf32>
    %21 = arith.truncf %20 : vector<24x128xf32> to vector<24x128xbf16>
    %c0_13 = arith.constant 0 : index
    %c0_14 = arith.constant 0 : index
    %22 = vector.load %arg5[%c0_13, %c0_14] : memref<24x24xbf16, #tpu.memory_space<vmem>>, vector<24x24xbf16>
    %cst_15 = arith.constant dense<0.000000e+00> : vector<24x128xf32>
    %23 = tpu.matmul %22, %21, %cst_15 {dimension_numbers = #tpu.dot_dimension_numbers<[1], [0], [0], [1], [0, 0, 1, 1], [], []>} : vector<24x24xbf16>, vector<24x128xbf16>, vector<24x128xf32> -> vector<24x128xf32>
    %c48 = arith.constant 48 : index
    %c0_16 = arith.constant 0 : index
    %24 = vector.load %arg7[%c48, %c0_16] : memref<80x1xf32, #tpu.memory_space<vmem>>, vector<24x1xf32>
    %25 = vector.broadcast %24 : vector<24x1xf32> to vector<24x128xf32>
    %26 = arith.addf %23, %25 : vector<24x128xf32>
    %cst_17 = arith.constant 0.000000e+00 : f32
    %27 = vector.broadcast %cst_17 : f32 to vector<24x128xf32>
    %28 = arith.maximumf %26, %27 : vector<24x128xf32>
    %29 = arith.truncf %28 : vector<24x128xf32> to vector<24x128xbf16>
    %c0_18 = arith.constant 0 : index
    %c0_19 = arith.constant 0 : index
    %30 = vector.load %arg6[%c0_18, %c0_19] : memref<8x24xbf16, #tpu.memory_space<vmem>>, vector<8x24xbf16>
    %cst_20 = arith.constant dense<0.000000e+00> : vector<8x128xf32>
    %31 = tpu.matmul %30, %29, %cst_20 {dimension_numbers = #tpu.dot_dimension_numbers<[1], [0], [0], [1], [0, 0, 1, 1], [], []>} : vector<8x24xbf16>, vector<24x128xbf16>, vector<8x128xf32> -> vector<8x128xf32>
    %c72 = arith.constant 72 : index
    %c0_21 = arith.constant 0 : index
    %32 = vector.load %arg7[%c72, %c0_21] : memref<80x1xf32, #tpu.memory_space<vmem>>, vector<8x1xf32>
    %33 = vector.broadcast %32 : vector<8x1xf32> to vector<8x128xf32>
    %34 = arith.addf %31, %33 : vector<8x128xf32>
    %cst_22 = arith.constant 0.000000e+00 : f32
    %35 = vector.broadcast %cst_22 : f32 to vector<8x128xf32>
    %36 = arith.maximumf %34, %35 : vector<8x128xf32>
    %c0_23 = arith.constant 0 : index
    %c0_24 = arith.constant 0 : index
    %c0_25 = arith.constant 0 : index
    %37 = vector.load %arg8[%c0_23, %c0_24, %c0_25] : memref<1x8x128xf32, #tpu.memory_space<vmem>>, vector<1x8x128xf32>
    %38 = vector.shape_cast %37 : vector<1x8x128xf32> to vector<8x128xf32>
    %39 = arith.addf %38, %36 : vector<8x128xf32>
    %c0_26 = arith.constant 0 : index
    %c0_27 = arith.constant 0 : index
    %c0_28 = arith.constant 0 : index
    %40 = vector.load %arg8[%c0_26, %c0_27, %c0_28] : memref<1x8x128xf32, #tpu.memory_space<vmem>>, vector<1x8x128xf32>
    %41 = vector.shape_cast %40 : vector<1x8x128xf32> to vector<8x128xf32>
    %42 = vector.shape_cast %39 : vector<8x128xf32> to vector<1x8x128xf32>
    tpu.vector_store %arg8[%c0_26, %c0_27, %c0_28], %42 {strides = array<i32>} : memref<1x8x128xf32, #tpu.memory_space<vmem>>, vector<1x8x128xf32>,
    %c0_29 = arith.constant 0 : index
    %c0_30 = arith.constant 0 : index
    %c0_31 = arith.constant 0 : index
    %43 = vector.load %arg9[%c0_29, %c0_30, %c0_31] : memref<1x8x128xf32, #tpu.memory_space<vmem>>, vector<1x8x128xf32>
    %44 = vector.shape_cast %43 : vector<1x8x128xf32> to vector<8x128xf32>
    %45 = arith.mulf %36, %36 : vector<8x128xf32>
    %46 = arith.addf %44, %45 : vector<8x128xf32>
    %c0_32 = arith.constant 0 : index
    %c0_33 = arith.constant 0 : index
    %c0_34 = arith.constant 0 : index
    %47 = vector.load %arg9[%c0_32, %c0_33, %c0_34] : memref<1x8x128xf32, #tpu.memory_space<vmem>>, vector<1x8x128xf32>
    %48 = vector.shape_cast %47 : vector<1x8x128xf32> to vector<8x128xf32>
    %49 = vector.shape_cast %46 : vector<8x128xf32> to vector<1x8x128xf32>
    tpu.vector_store %arg9[%c0_32, %c0_33, %c0_34], %49 {strides = array<i32>} : memref<1x8x128xf32, #tpu.memory_space<vmem>>, vector<1x8x128xf32>,
    return
  }
  func.func @transform_0(%arg0: i32, %arg1: i32) -> (i32, i32, i32) {
    %c0_i32 = arith.constant 0 : i32
    %c0_i32_0 = arith.constant 0 : i32
    return %arg0, %c0_i32, %arg1 : i32, i32, i32
  }
  func.func @transform_1(%arg0: i32, %arg1: i32) -> (i32, i32) {
    %c0_i32 = arith.constant 0 : i32
    %c0_i32_0 = arith.constant 0 : i32
    %c0_i32_1 = arith.constant 0 : i32
    return %c0_i32, %c0_i32_0 : i32, i32
  }
  func.func @transform_2(%arg0: i32, %arg1: i32) -> (i32, i32) {
    %c0_i32 = arith.constant 0 : i32
    %c0_i32_0 = arith.constant 0 : i32
    %c0_i32_1 = arith.constant 0 : i32
    return %c0_i32, %c0_i32_0 : i32, i32
  }
  func.func @transform_3(%arg0: i32, %arg1: i32) -> (i32, i32) {
    %c0_i32 = arith.constant 0 : i32
    %c0_i32_0 = arith.constant 0 : i32
    %c0_i32_1 = arith.constant 0 : i32
    return %c0_i32, %c0_i32_0 : i32, i32
  }
  func.func @transform_4(%arg0: i32, %arg1: i32) -> (i32, i32) {
    %c0_i32 = arith.constant 0 : i32
    %c0_i32_0 = arith.constant 0 : i32
    %c0_i32_1 = arith.constant 0 : i32
    return %c0_i32, %c0_i32_0 : i32, i32
  }
  func.func @transform_5(%arg0: i32, %arg1: i32) -> (i32, i32) {
    %c0_i32 = arith.constant 0 : i32
    %c0_i32_0 = arith.constant 0 : i32
    %c0_i32_1 = arith.constant 0 : i32
    return %c0_i32, %c0_i32_0 : i32, i32
  }
  func.func @transform_6(%arg0: i32, %arg1: i32) -> (i32, i32, i32) {
    %c0_i32 = arith.constant 0 : i32
    %c0_i32_0 = arith.constant 0 : i32
    %c0_i32_1 = arith.constant 0 : i32
    return %arg0, %c0_i32, %c0_i32_0 : i32, i32, i32
  }
  func.func @transform_7(%arg0: i32, %arg1: i32) -> (i32, i32, i32) {
    %c0_i32 = arith.constant 0 : i32
    %c0_i32_0 = arith.constant 0 : i32
    %c0_i32_1 = arith.constant 0 : i32
    return %arg0, %c0_i32, %c0_i32_0 : i32, i32, i32
  }
}

module attributes {stable_mosaic.version = 11 : i64} {
  func.func @apply_kernel(%arg0: i32, %arg1: i32, %arg2: memref<1x8x128xf32, #tpu.memory_space<vmem>>, %arg3: memref<24x8xbf16, #tpu.memory_space<vmem>>, %arg4: memref<24x24xbf16, #tpu.memory_space<vmem>>, %arg5: memref<24x24xbf16, #tpu.memory_space<vmem>>, %arg6: memref<8x24xbf16, #tpu.memory_space<vmem>>, %arg7: memref<96x1xf32, #tpu.memory_space<vmem>>, %arg8: memref<1x8x128xf32, #tpu.memory_space<vmem>>) attributes {dimension_semantics = [#tpu.dimension_semantics<parallel>, #tpu.dimension_semantics<parallel>], iteration_bounds = array<i64: 2, 1>, scalar_prefetch = 0 : i64, scratch_operands = 0 : i64, tpu.core_type = #tpu.core_type<tc>, window_params = [{transform_indices = @transform_0, window_bounds = array<i64: 1, 8, 128>}, {pipeline_mode = #tpu.pipeline_mode<synchronous>, transform_indices = @transform_1, window_bounds = array<i64: 24, 8>}, {pipeline_mode = #tpu.pipeline_mode<synchronous>, transform_indices = @transform_2, window_bounds = array<i64: 24, 24>}, {pipeline_mode = #tpu.pipeline_mode<synchronous>, transform_indices = @transform_3, window_bounds = array<i64: 24, 24>}, {pipeline_mode = #tpu.pipeline_mode<synchronous>, transform_indices = @transform_4, window_bounds = array<i64: 8, 24>}, {pipeline_mode = #tpu.pipeline_mode<synchronous>, transform_indices = @transform_5, window_bounds = array<i64: 96, 1>}, {transform_indices = @transform_6, window_bounds = array<i64: 1, 8, 128>}]} {
    %c0 = arith.constant 0 : index
    %c0_0 = arith.constant 0 : index
    %c0_1 = arith.constant 0 : index
    %0 = vector.load %arg2[%c0, %c0_0, %c0_1] : memref<1x8x128xf32, #tpu.memory_space<vmem>>, vector<1x8x128xf32>
    %1 = vector.shape_cast %0 : vector<1x8x128xf32> to vector<8x128xf32>
    %2 = arith.truncf %1 : vector<8x128xf32> to vector<8x128xbf16>
    %c0_2 = arith.constant 0 : index
    %c0_3 = arith.constant 0 : index
    %3 = vector.load %arg3[%c0_2, %c0_3] : memref<24x8xbf16, #tpu.memory_space<vmem>>, vector<24x8xbf16>
    %cst = arith.constant dense<0.000000e+00> : vector<24x128xf32>
    %4 = tpu.matmul %3, %2, %cst {dimension_numbers = #tpu.dot_dimension_numbers<[1], [0], [0], [1], [0, 0, 1, 1], [], []>} : vector<24x8xbf16>, vector<8x128xbf16>, vector<24x128xf32> -> vector<24x128xf32>
    %c0_4 = arith.constant 0 : index
    %c0_5 = arith.constant 0 : index
    %5 = vector.load %arg7[%c0_4, %c0_5] : memref<96x1xf32, #tpu.memory_space<vmem>>, vector<24x1xf32>
    %6 = vector.broadcast %5 : vector<24x1xf32> to vector<24x128xf32>
    %7 = arith.addf %4, %6 : vector<24x128xf32>
    %cst_6 = arith.constant 0.000000e+00 : f32
    %8 = vector.broadcast %cst_6 : f32 to vector<24x128xf32>
    %9 = arith.maximumf %7, %8 : vector<24x128xf32>
    %10 = arith.truncf %9 : vector<24x128xf32> to vector<24x128xbf16>
    %c0_7 = arith.constant 0 : index
    %c0_8 = arith.constant 0 : index
    %11 = vector.load %arg4[%c0_7, %c0_8] : memref<24x24xbf16, #tpu.memory_space<vmem>>, vector<24x24xbf16>
    %cst_9 = arith.constant dense<0.000000e+00> : vector<24x128xf32>
    %12 = tpu.matmul %11, %10, %cst_9 {dimension_numbers = #tpu.dot_dimension_numbers<[1], [0], [0], [1], [0, 0, 1, 1], [], []>} : vector<24x24xbf16>, vector<24x128xbf16>, vector<24x128xf32> -> vector<24x128xf32>
    %c24 = arith.constant 24 : index
    %c0_10 = arith.constant 0 : index
    %13 = vector.load %arg7[%c24, %c0_10] : memref<96x1xf32, #tpu.memory_space<vmem>>, vector<24x1xf32>
    %14 = vector.broadcast %13 : vector<24x1xf32> to vector<24x128xf32>
    %15 = arith.addf %12, %14 : vector<24x128xf32>
    %cst_11 = arith.constant 0.000000e+00 : f32
    %16 = vector.broadcast %cst_11 : f32 to vector<24x128xf32>
    %17 = arith.maximumf %15, %16 : vector<24x128xf32>
    %18 = arith.truncf %17 : vector<24x128xf32> to vector<24x128xbf16>
    %c0_12 = arith.constant 0 : index
    %c0_13 = arith.constant 0 : index
    %19 = vector.load %arg5[%c0_12, %c0_13] : memref<24x24xbf16, #tpu.memory_space<vmem>>, vector<24x24xbf16>
    %cst_14 = arith.constant dense<0.000000e+00> : vector<24x128xf32>
    %20 = tpu.matmul %19, %18, %cst_14 {dimension_numbers = #tpu.dot_dimension_numbers<[1], [0], [0], [1], [0, 0, 1, 1], [], []>} : vector<24x24xbf16>, vector<24x128xbf16>, vector<24x128xf32> -> vector<24x128xf32>
    %c48 = arith.constant 48 : index
    %c0_15 = arith.constant 0 : index
    %21 = vector.load %arg7[%c48, %c0_15] : memref<96x1xf32, #tpu.memory_space<vmem>>, vector<24x1xf32>
    %22 = vector.broadcast %21 : vector<24x1xf32> to vector<24x128xf32>
    %23 = arith.addf %20, %22 : vector<24x128xf32>
    %cst_16 = arith.constant 0.000000e+00 : f32
    %24 = vector.broadcast %cst_16 : f32 to vector<24x128xf32>
    %25 = arith.maximumf %23, %24 : vector<24x128xf32>
    %26 = arith.truncf %25 : vector<24x128xf32> to vector<24x128xbf16>
    %c0_17 = arith.constant 0 : index
    %c0_18 = arith.constant 0 : index
    %27 = vector.load %arg6[%c0_17, %c0_18] : memref<8x24xbf16, #tpu.memory_space<vmem>>, vector<8x24xbf16>
    %cst_19 = arith.constant dense<0.000000e+00> : vector<8x128xf32>
    %28 = tpu.matmul %27, %26, %cst_19 {dimension_numbers = #tpu.dot_dimension_numbers<[1], [0], [0], [1], [0, 0, 1, 1], [], []>} : vector<8x24xbf16>, vector<24x128xbf16>, vector<8x128xf32> -> vector<8x128xf32>
    %c72 = arith.constant 72 : index
    %c0_20 = arith.constant 0 : index
    %29 = vector.load %arg7[%c72, %c0_20] : memref<96x1xf32, #tpu.memory_space<vmem>>, vector<8x1xf32>
    %30 = vector.broadcast %29 : vector<8x1xf32> to vector<8x128xf32>
    %31 = arith.addf %28, %30 : vector<8x128xf32>
    %cst_21 = arith.constant 0.000000e+00 : f32
    %32 = vector.broadcast %cst_21 : f32 to vector<8x128xf32>
    %33 = arith.maximumf %31, %32 : vector<8x128xf32>
    %c80 = arith.constant 80 : index
    %c0_22 = arith.constant 0 : index
    %34 = vector.load %arg7[%c80, %c0_22] : memref<96x1xf32, #tpu.memory_space<vmem>>, vector<8x1xf32>
    %35 = vector.broadcast %34 : vector<8x1xf32> to vector<8x128xf32>
    %36 = arith.mulf %33, %35 : vector<8x128xf32>
    %c88 = arith.constant 88 : index
    %c0_23 = arith.constant 0 : index
    %37 = vector.load %arg7[%c88, %c0_23] : memref<96x1xf32, #tpu.memory_space<vmem>>, vector<8x1xf32>
    %38 = vector.broadcast %37 : vector<8x1xf32> to vector<8x128xf32>
    %39 = arith.addf %36, %38 : vector<8x128xf32>
    %cst_24 = arith.constant 0.000000e+00 : f32
    %40 = vector.broadcast %cst_24 : f32 to vector<8x128xf32>
    %41 = arith.maximumf %39, %40 : vector<8x128xf32>
    %c0_25 = arith.constant 0 : index
    %c0_26 = arith.constant 0 : index
    %c0_27 = arith.constant 0 : index
    %42 = vector.load %arg8[%c0_25, %c0_26, %c0_27] : memref<1x8x128xf32, #tpu.memory_space<vmem>>, vector<1x8x128xf32>
    %43 = vector.shape_cast %42 : vector<1x8x128xf32> to vector<8x128xf32>
    %44 = vector.shape_cast %41 : vector<8x128xf32> to vector<1x8x128xf32>
    tpu.vector_store %arg8[%c0_25, %c0_26, %c0_27], %44 {strides = array<i32>} : memref<1x8x128xf32, #tpu.memory_space<vmem>>, vector<1x8x128xf32>,
    return
  }
  func.func @transform_0(%arg0: i32, %arg1: i32) -> (i32, i32, i32) {
    %c0_i32 = arith.constant 0 : i32
    %c0_i32_0 = arith.constant 0 : i32
    return %arg0, %c0_i32, %arg1 : i32, i32, i32
  }
  func.func @transform_1(%arg0: i32, %arg1: i32) -> (i32, i32) {
    %c0_i32 = arith.constant 0 : i32
    %c0_i32_0 = arith.constant 0 : i32
    %c0_i32_1 = arith.constant 0 : i32
    return %c0_i32, %c0_i32_0 : i32, i32
  }
  func.func @transform_2(%arg0: i32, %arg1: i32) -> (i32, i32) {
    %c0_i32 = arith.constant 0 : i32
    %c0_i32_0 = arith.constant 0 : i32
    %c0_i32_1 = arith.constant 0 : i32
    return %c0_i32, %c0_i32_0 : i32, i32
  }
  func.func @transform_3(%arg0: i32, %arg1: i32) -> (i32, i32) {
    %c0_i32 = arith.constant 0 : i32
    %c0_i32_0 = arith.constant 0 : i32
    %c0_i32_1 = arith.constant 0 : i32
    return %c0_i32, %c0_i32_0 : i32, i32
  }
  func.func @transform_4(%arg0: i32, %arg1: i32) -> (i32, i32) {
    %c0_i32 = arith.constant 0 : i32
    %c0_i32_0 = arith.constant 0 : i32
    %c0_i32_1 = arith.constant 0 : i32
    return %c0_i32, %c0_i32_0 : i32, i32
  }
  func.func @transform_5(%arg0: i32, %arg1: i32) -> (i32, i32) {
    %c0_i32 = arith.constant 0 : i32
    %c0_i32_0 = arith.constant 0 : i32
    %c0_i32_1 = arith.constant 0 : i32
    return %c0_i32, %c0_i32_0 : i32, i32
  }
  func.func @transform_6(%arg0: i32, %arg1: i32) -> (i32, i32, i32) {
    %c0_i32 = arith.constant 0 : i32
    %c0_i32_0 = arith.constant 0 : i32
    return %arg0, %c0_i32, %arg1 : i32, i32, i32
  }
}

</mosaic_0001>

<llo_original>
// kernel: fc_forward.2
$region0: #{fc_forward.2}
  #allocation0 [shape = 'u32[]', space=smem, size = 0x4, offset = 0x4, fixed_abs, tag = 'smem constant byte address 0x4 - core index']
  #allocation1 [shape = 'u32[72,128]{1,0:T(1,128)}', space=vmem, size = 0x9000, scoped, tag = 'internal scratch']
  %s0 = inlined_call_operand.vmem [shape: f32[2,8,128], index: 0, kind: input, shape index: {}]
  %s1 = inlined_call_operand.vmem [shape: bf16[24,8], index: 1, kind: input, shape index: {}]
  %s2 = inlined_call_operand.vmem [shape: bf16[24,24], index: 2, kind: input, shape index: {}]
  %s3 = inlined_call_operand.vmem [shape: bf16[24,24], index: 3, kind: input, shape index: {}]
  %s4 = inlined_call_operand.vmem [shape: bf16[8,24], index: 4, kind: input, shape index: {}]
  %s5 = inlined_call_operand.vmem [shape: f32[80,1], index: 5, kind: input, shape index: {}]
  %s6 = inlined_call_operand.vmem [shape: f32[2,8,128], index: 6, kind: output, shape index: {0}]
  %s7 = inlined_call_operand.vmem [shape: f32[2,8,128], index: 7, kind: output, shape index: {1}]
  %8 = xla_tuple %s6, %s7
  %s9 = sld [smem:[#allocation0]]
  $region69: #{fc_forward.2} parent=0
    _
  %s11 = ssub.s32 1, %s9
  %s12 = scalar_select 0, %s11, %s9
  loop: start=0, step=1, limit=4
  $region2: #{fc_forward.2} parent=0 // loop_pre_header
    _
  $region3: #{fc_forward.2} parent=0 // loop_header
    %s14 = sphi 0, %s18
    %p15 = scmp.ge.s32.totalorder %s14, 4
    %s21 = sphi 0, %s33
    %s22 = sphi 0, %s29
    %s23 = sphi 0, %s21
    %s24 = sphi 0, %s22
    %s25 = sphi 0, %s23
    %s26 = sphi 0, %s24
    %s38 = sphi 0, %s40
    %s41 = sphi 0, %s38
    %s42 = sphi 0, %s41
    %s58 = sphi 0, %s42
    %s62 = sphi 0, %s62
    %s64 = sphi 0, %s62
    %s65 = sphi 0, %s64
    %s79 = sphi 0, %s65
    %s83 = sphi 0, %s83
    %s85 = sphi 0, %s83
    %s86 = sphi 0, %s85
    %s100 = sphi 0, %s86
    %s104 = sphi 0, %s104
    %s106 = sphi 0, %s104
    %s107 = sphi 0, %s106
    %s121 = sphi 0, %s107
    %s125 = sphi 0, %s125
    %s127 = sphi 0, %s125
    %s128 = sphi 0, %s127
    %s142 = sphi 0, %s128
    %s146 = sphi 0, %s146
    %s148 = sphi 0, %s146
    %s149 = sphi 0, %s148
    %s163 = sphi 0, %s149
    %s169 = sphi 0, %s171
    %s172 = sphi 0, %s169
    %s173 = sphi 0, %s172
    %s189 = sphi 0, %s173
    %s195 = sphi 0, %s197
    %s198 = sphi 0, %s195
    %s199 = sphi 0, %s198
    %s215 = sphi 0, %s199
  $region4: #{fc_forward.2} parent=0 // loop_header_branch
    %17 = sbr.rel (%p15) target = $region8
  $region5: #{fc_forward.2} parent=0 // loop_body
    %s19 = ssub.s32 %s14, 1
    %s20 = ssub.s32 %s14, 2
    %s27 = sadd.s32 1, %s22
    %p28 = scmp.ge.s32.totalorder %s27, 1
    %s29 = scalar_select %p28, 0, %s27
    %s30 = sadd.s32 1, %s21
    %s31 = scalar_select %p28, %s30, %s21
    %p32 = scmp.ge.s32.totalorder %s31, 2
    %s33 = scalar_select %p32, 0, %s31
    %s34 = ssub.s32 %s21, %s33
    %s35 = ssub.s32 %s22, %s29
    %s36 = sor.u32 %s34, %s35
    %p37 = scmp.eq.s32.totalorder %s36, 0
    %s39 = sadd.s32 %s38, 1
    %s40 = scalar_select %p37, %s38, %s39
    %p43 = pneg %p37
    %p44 = scmp.eq.s32.totalorder %s14, 1
    %p45 = por %p43, %p44
    %p46 = scmp.ne.s32.totalorder %s38, %s41
    %p47 = scmp.eq.s32.totalorder %s14, 0
    %p48 = por %p46, %p47
    %p49 = scmp.ne.s32.totalorder %s38, %s41
    %p50 = scmp.eq.s32.totalorder %s19, 1
    %p51 = por %p49, %p50
    %p52 = scmp.ne.s32.totalorder %s41, %s42
    %p53 = scmp.eq.s32.totalorder %s19, 0
    %p54 = por %p52, %p53
    %p55 = scmp.ne.s32.totalorder %s41, %s42
    %p56 = scmp.eq.s32.totalorder %s20, 1
    %p57 = por %p55, %p56
    %p59 = scmp.ne.s32.totalorder %s42, %s58
    %p60 = scmp.eq.s32.totalorder %s20, 0
    %p61 = por %p59, %p60
    %s63 = sadd.s32 %s62, 1
    %p66 = scmp.eq.s32.totalorder %s14, 1
    %p67 = scmp.ne.s32.totalorder %s62, %s64
    %p68 = scmp.eq.s32.totalorder %s14, 0
    %p69 = por %p67, %p68
    %p70 = scmp.ne.s32.totalorder %s62, %s64
    %p71 = scmp.eq.s32.totalorder %s19, 1
    %p72 = por %p70, %p71
    %p73 = scmp.ne.s32.totalorder %s64, %s65
    %p74 = scmp.eq.s32.totalorder %s19, 0
    %p75 = por %p73, %p74
    %p76 = scmp.ne.s32.totalorder %s64, %s65
    %p77 = scmp.eq.s32.totalorder %s20, 1
    %p78 = por %p76, %p77
    %p80 = scmp.ne.s32.totalorder %s65, %s79
    %p81 = scmp.eq.s32.totalorder %s20, 0
    %p82 = por %p80, %p81
    %s84 = sadd.s32 %s83, 1
    %p87 = scmp.eq.s32.totalorder %s14, 1
    %p88 = scmp.ne.s32.totalorder %s83, %s85
    %p89 = scmp.eq.s32.totalorder %s14, 0
    %p90 = por %p88, %p89
    %p91 = scmp.ne.s32.totalorder %s83, %s85
    %p92 = scmp.eq.s32.totalorder %s19, 1
    %p93 = por %p91, %p92
    %p94 = scmp.ne.s32.totalorder %s85, %s86
    %p95 = scmp.eq.s32.totalorder %s19, 0
    %p96 = por %p94, %p95
    %p97 = scmp.ne.s32.totalorder %s85, %s86
    %p98 = scmp.eq.s32.totalorder %s20, 1
    %p99 = por %p97, %p98
    %p101 = scmp.ne.s32.totalorder %s86, %s100
    %p102 = scmp.eq.s32.totalorder %s20, 0
    %p103 = por %p101, %p102
    %s105 = sadd.s32 %s104, 1
    %p108 = scmp.eq.s32.totalorder %s14, 1
    %p109 = scmp.ne.s32.totalorder %s104, %s106
    %p110 = scmp.eq.s32.totalorder %s14, 0
    %p111 = por %p109, %p110
    %p112 = scmp.ne.s32.totalorder %s104, %s106
    %p113 = scmp.eq.s32.totalorder %s19, 1
    %p114 = por %p112, %p113
    %p115 = scmp.ne.s32.totalorder %s106, %s107
    %p116 = scmp.eq.s32.totalorder %s19, 0
    %p117 = por %p115, %p116
    %p118 = scmp.ne.s32.totalorder %s106, %s107
    %p119 = scmp.eq.s32.totalorder %s20, 1
    %p120 = por %p118, %p119
    %p122 = scmp.ne.s32.totalorder %s107, %s121
    %p123 = scmp.eq.s32.totalorder %s20, 0
    %p124 = por %p122, %p123
    %s126 = sadd.s32 %s125, 1
    %p129 = scmp.eq.s32.totalorder %s14, 1
    %p130 = scmp.ne.s32.totalorder %s125, %s127
    %p131 = scmp.eq.s32.totalorder %s14, 0
    %p132 = por %p130, %p131
    %p133 = scmp.ne.s32.totalorder %s125, %s127
    %p134 = scmp.eq.s32.totalorder %s19, 1
    %p135 = por %p133, %p134
    %p136 = scmp.ne.s32.totalorder %s127, %s128
    %p137 = scmp.eq.s32.totalorder %s19, 0
    %p138 = por %p136, %p137
    %p139 = scmp.ne.s32.totalorder %s127, %s128
    %p140 = scmp.eq.s32.totalorder %s20, 1
    %p141 = por %p139, %p140
    %p143 = scmp.ne.s32.totalorder %s128, %s142
    %p144 = scmp.eq.s32.totalorder %s20, 0
    %p145 = por %p143, %p144
    %s147 = sadd.s32 %s146, 1
    %p150 = scmp.eq.s32.totalorder %s14, 1
    %p151 = scmp.ne.s32.totalorder %s146, %s148
    %p152 = scmp.eq.s32.totalorder %s14, 0
    %p153 = por %p151, %p152
    %p154 = scmp.ne.s32.totalorder %s146, %s148
    %p155 = scmp.eq.s32.totalorder %s19, 1
    %p156 = por %p154, %p155
    %p157 = scmp.ne.s32.totalorder %s148, %s149
    %p158 = scmp.eq.s32.totalorder %s19, 0
    %p159 = por %p157, %p158
    %p160 = scmp.ne.s32.totalorder %s148, %s149
    %p161 = scmp.eq.s32.totalorder %s20, 1
    %p162 = por %p160, %p161
    %p164 = scmp.ne.s32.totalorder %s149, %s163
    %p165 = scmp.eq.s32.totalorder %s20, 0
    %p166 = por %p164, %p165
    %s167 = ssub.s32 %s21, %s33
    %p168 = scmp.eq.s32.totalorder %s167, 0
    %s170 = sadd.s32 %s169, 1
    %s171 = scalar_select %p168, %s169, %s170
    %p174 = pneg %p168
    %p175 = scmp.eq.s32.totalorder %s14, 1
    %p176 = por %p174, %p175
    %p177 = scmp.ne.s32.totalorder %s169, %s172
    %p178 = scmp.eq.s32.totalorder %s14, 0
    %p179 = por %p177, %p178
    %p180 = scmp.ne.s32.totalorder %s169, %s172
    %p181 = scmp.eq.s32.totalorder %s19, 1
    %p182 = por %p180, %p181
    %p183 = scmp.ne.s32.totalorder %s172, %s173
    %p184 = scmp.eq.s32.totalorder %s19, 0
    %p185 = por %p183, %p184
    %p186 = scmp.ne.s32.totalorder %s172, %s173
    %p187 = scmp.eq.s32.totalorder %s20, 1
    %p188 = por %p186, %p187
    %p190 = scmp.ne.s32.totalorder %s173, %s189
    %p191 = scmp.eq.s32.totalorder %s20, 0
    %p192 = por %p190, %p191
    %s193 = ssub.s32 %s21, %s33
    %p194 = scmp.eq.s32.totalorder %s193, 0
    %s196 = sadd.s32 %s195, 1
    %s197 = scalar_select %p194, %s195, %s196
    %p200 = pneg %p194
    %p201 = scmp.eq.s32.totalorder %s14, 1
    %p202 = por %p200, %p201
    %p203 = scmp.ne.s32.totalorder %s195, %s198
    %p204 = scmp.eq.s32.totalorder %s14, 0
    %p205 = por %p203, %p204
    %p206 = scmp.ne.s32.totalorder %s195, %s198
    %p207 = scmp.eq.s32.totalorder %s19, 1
    %p208 = por %p206, %p207
    %p209 = scmp.ne.s32.totalorder %s198, %s199
    %p210 = scmp.eq.s32.totalorder %s19, 0
    %p211 = por %p209, %p210
    %p212 = scmp.ne.s32.totalorder %s198, %s199
    %p213 = scmp.eq.s32.totalorder %s20, 1
    %p214 = por %p212, %p213
    %p216 = scmp.ne.s32.totalorder %s199, %s215
    %p217 = scmp.eq.s32.totalorder %s20, 0
    %p218 = por %p216, %p217
    %p219 = scmp.le.s32.totalorder 1, %s14
    %p220 = scmp.lt.s32.totalorder %s14, 3
    %p221 = pnand %p219, %p220
    %p222 = pneg %p221
    // Predicated region
    $region9: #{fc_forward.2} parent=5 // pred_check
      _
    $region10: #{fc_forward.2} parent=5 // pred_check_branch
      %224 = sbr.rel (%p221) target = $region12
    $region11: #{fc_forward.2} parent=5 // pred_region
      %s225 = ssub.s32 %s14, 1
      // Predicated region
      $region13: #{fc_forward.2} parent=11 // pred_check
        %p226 = pneg %p75
      $region14: #{fc_forward.2} parent=11 // pred_check_branch
        %228 = sbr.rel (%p226) target = $region16
      $region15: #{fc_forward.2} parent=11 // pred_region
        _
      $region16: #{fc_forward.2} parent=11 // pred_fallthru
        _
      // Predicated region
      $region17: #{fc_forward.2} parent=11 // pred_check
        %p229 = pneg %p96
      $region18: #{fc_forward.2} parent=11 // pred_check_branch
        %231 = sbr.rel (%p229) target = $region20
      $region19: #{fc_forward.2} parent=11 // pred_region
        _
      $region20: #{fc_forward.2} parent=11 // pred_fallthru
        _
      // Predicated region
      $region21: #{fc_forward.2} parent=11 // pred_check
        %p232 = pneg %p117
      $region22: #{fc_forward.2} parent=11 // pred_check_branch
        %234 = sbr.rel (%p232) target = $region24
      $region23: #{fc_forward.2} parent=11 // pred_region
        _
      $region24: #{fc_forward.2} parent=11 // pred_fallthru
        _
      // Predicated region
      $region25: #{fc_forward.2} parent=11 // pred_check
        %p235 = pneg %p138
      $region26: #{fc_forward.2} parent=11 // pred_check_branch
        %237 = sbr.rel (%p235) target = $region28
      $region27: #{fc_forward.2} parent=11 // pred_region
        _
      $region28: #{fc_forward.2} parent=11 // pred_fallthru
        _
      // Predicated region
      $region29: #{fc_forward.2} parent=11 // pred_check
        %p238 = pneg %p159
      $region30: #{fc_forward.2} parent=11 // pred_check_branch
        %240 = sbr.rel (%p238) target = $region32
      $region31: #{fc_forward.2} parent=11 // pred_region
        _
      $region32: #{fc_forward.2} parent=11 // pred_fallthru
        _
    $region12: #{fc_forward.2} parent=5 // pred_fallthru
      _
    %p241 = scmp.lt.s32.totalorder %s14, 2
    // Predicated region
    $region33: #{fc_forward.2} parent=5 // pred_check
      %p242 = pneg %p241
    $region34: #{fc_forward.2} parent=5 // pred_check_branch
      %244 = sbr.rel (%p242) target = $region36
    $region35: #{fc_forward.2} parent=5 // pred_region
      // Predicated region
      $region37: #{fc_forward.2} parent=35 // pred_check
        %p245 = pneg %p48
      $region38: #{fc_forward.2} parent=35 // pred_check_branch
        %247 = sbr.rel (%p245) target = $region40
      $region39: #{fc_forward.2} parent=35 // pred_region
        %p248 = scmp.lt.s32.totalorder %s21, 1
        %s249 = scalar_select %p248, %s21, 1
        %p250 = scmp.lt.s32.totalorder %s22, 0
        %s251 = scalar_select %p250, %s22, 0
        %s252 = sadd.s32 %s251, %s249
        %s253 = smul.addr %s252, 8
        %s254 = scalar_lea.vmem %s0, %s253
      $region40: #{fc_forward.2} parent=35 // pred_fallthru
        _
    $region36: #{fc_forward.2} parent=5 // pred_fallthru
      _
    %p255 = scmp.le.s32.totalorder 1, %s14
    %p256 = scmp.lt.s32.totalorder %s14, 3
    %p257 = pnand %p255, %p256
    %p258 = pneg %p257
    // Predicated region
    $region41: #{fc_forward.2} parent=5 // pred_check
      _
    $region42: #{fc_forward.2} parent=5 // pred_check_branch
      %260 = sbr.rel (%p257) target = $region44
    $region43: #{fc_forward.2} parent=5 // pred_region
      %s261 = ssub.s32 %s14, 1
      %p262 = scmp.lt.s32.totalorder %s23, 1
      %s263 = scalar_select %p262, %s23, 1
      %p264 = scmp.lt.s32.totalorder %s24, 0
      %s265 = scalar_select %p264, %s24, 0
      %s266 = sadd.s32 %s265, %s263
      %s267 = smul.addr %s266, 8
      %s268 = scalar_lea.vmem %s0, %s267
      %p269 = pneg %p54
      %p270 = pneg %p51
      %p271 = pneg %p75
      %p272 = pneg %p72
      %p273 = pneg %p96
      %p274 = pneg %p93
      %p275 = pneg %p117
      %p276 = pneg %p114
      %p277 = pneg %p138
      %p278 = pneg %p135
      %p279 = pneg %p159
      %p280 = pneg %p156
      %p281 = pneg %p185
      %p282 = pneg %p182
      %p283 = scmp.lt.s32.totalorder %s23, 1
      %s284 = scalar_select %p283, %s23, 1
      %s285 = smul.addr %s284, 8
      %s286 = scalar_lea.vmem %s6, %s285
      %p287 = pneg %p211
      %p288 = pneg %p208
      %p289 = scmp.lt.s32.totalorder %s23, 1
      %s290 = scalar_select %p289, %s23, 1
      %s291 = smul.addr %s290, 8
      %s292 = scalar_lea.vmem %s7, %s291
      %p293 = scmp.lt.s32.totalorder %s23, 1
      %s294 = scalar_select %p293, %s23, 1
      %p295 = scmp.lt.s32.totalorder %s24, 0
      %s296 = scalar_select %p295, %s24, 0
      %s297 = sadd.s32 %s296, %s294
      %s298 = smul.addr %s297, 8
      %s299 = scalar_lea.vmem %s0, %s298
      %p300 = scmp.lt.s32.totalorder %s23, 1
      %s301 = scalar_select %p300, %s23, 1
      %s302 = smul.addr %s301, 8
      %s303 = scalar_lea.vmem %s6, %s302
      %p304 = scmp.lt.s32.totalorder %s23, 1
      %s305 = scalar_select %p304, %s23, 1
      %s306 = smul.addr %s305, 8
      %s307 = scalar_lea.vmem %s7, %s306
      %p309 = scmp.eq.s32.totalorder %s24, 0
      // Predicated region
      $region45: #{fc_forward.2} parent=43 // pred_check
        %p310 = pneg %p309
      $region46: #{fc_forward.2} parent=43 // pred_check_branch
        %312 = sbr.rel (%p310) target = $region48
      $region47: #{fc_forward.2} parent=43 // pred_region
        %313 = vst [vmem:[%s303] sm:$0xff] 0.0
        %314 = vst [vmem:[%s307] sm:$0xff] 0.0
      $region48: #{fc_forward.2} parent=43 // pred_fallthru
        _
      %v315 = vld [vmem:[%s299] sm:$0xff]
      %v316 = vpack.c.bf16 %v315, %v315
      %v317 = vld [vmem:[%s1] sm:$0xf]
      %v318 = vld [vmem:[%s1 + $0x4] sm:$0xf]
      %v319 = vld [vmem:[%s1 + $0x8] sm:$0xf]
      %v320 = vld [vmem:[%s5] sm:$0xff]
      %v321 = vld [vmem:[%s5 + $0x8] sm:$0xff]
      %v322 = vld [vmem:[%s5 + $0x10] sm:$0xff]
      %324 = vset.pattern.permute.xlu0 0
      %325 = vperm.xlu0 %324, %v320
      %v326 = vpop.permute.xlu0 %325
      %329 = vset.pattern.permute.xlu0 0
      %330 = vperm.xlu0 %329, %v321
      %v331 = vpop.permute.xlu0 %330
      %334 = vset.pattern.permute.xlu0 0
      %335 = vperm.xlu0 %334, %v322
      %v336 = vpop.permute.xlu0 %335
      %v341 = vunpack.c.l.b16 %v317
      %v342 = vunpack.c.l.b16 %v318
      %v343 = vunpack.c.l.b16 %v319
      %v344 = vpack.c.b16 %v342, %v341
      %v345 = vpack.c.b16 %v343, %v343
      %vm346 = vcmask 64512
      %v348 = vsel %vm346, %v344, 0
      %v351 = vsel %vm346, %v345, 0
      %vm353 = vcmask 1043456
      %v355 = vsel %vm353, %v316, 0
      %357 = vmatpush.bf16.msra.mxu0 0
      %358 = vmatpush.bf16.msra.mxu0 0
      %359 = vmatpush.bf16.msra.mxu0 0
      %360 = vmatpush.bf16.msra.mxu0 0
      %361 = vmatpush.bf16.msra.mxu0 0
      %362 = vmatpush.bf16.msra.mxu0 0
      %363 = vmatpush.bf16.msra.mxu0 0
      %364 = vmatpush.bf16.msra.mxu0 %v355
      %365 = vmatmul.bf16.gmra.mxu0 %v348
      %v366 = vpop.f32.mrf.mxu0
      %v367 = vadd.f32 %v326, %v366
      %v368 = vpop.f32.mrf.mxu0
      %v369 = vadd.f32 %v331, %v368
      %370 = vmatmul.bf16.gmra.mxu0 %v351
      %v371 = vpop.f32.mrf.mxu0
      %v372 = vadd.f32 %v336, %v371
      %v373 = vpop.f32.mrf.mxu0
      %374 = vdwg.mxu0
      %v375 = vmax.f32 %v367, 0.0
      %v376 = vmax.f32 %v369, 0.0
      %v377 = vmax.f32 %v372, 0.0
      %v378 = vpack.c.bf16 %v376, %v375
      %v379 = vpack.c.bf16 %v377, %v377
      %v380 = vld [vmem:[%s2] sm:$0xf]
      %v381 = vld [vmem:[%s2 + $0x4] sm:$0xf]
      %v382 = vld [vmem:[%s2 + $0x8] sm:$0xf]
      %v383 = vld [vmem:[%s5 + $0x18] sm:$0xff]
      %v384 = vld [vmem:[%s5 + $0x20] sm:$0xff]
      %v385 = vld [vmem:[%s5 + $0x28] sm:$0xff]
      %387 = vset.pattern.permute.xlu0 0
      %388 = vperm.xlu0 %387, %v383
      %v389 = vpop.permute.xlu0 %388
      %392 = vset.pattern.permute.xlu0 0
      %393 = vperm.xlu0 %392, %v384
      %v394 = vpop.permute.xlu0 %393
      %397 = vset.pattern.permute.xlu0 0
      %398 = vperm.xlu0 %397, %v385
      %v399 = vpop.permute.xlu0 %398
      %v404 = vunpack.c.l.b16 %v380
      %v405 = vunpack.c.l.b16 %v381
      %v406 = vunpack.c.l.b16 %v382
      %v407 = vpack.c.b16 %v405, %v404
      %v408 = vpack.c.b16 %v406, %v406
      %vm409 = vcmask 195584
      %v411 = vsel %vm409, %v407, 0
      %v414 = vsel %vm409, %v408, 0
      %v417 = vsel %vm353, %v379, 0
      %419 = vmatpush.bf16.msra.mxu0 0
      %420 = vmatpush.bf16.msra.mxu0 0
      %421 = vmatpush.bf16.msra.mxu0 0
      %422 = vmatpush.bf16.msra.mxu0 0
      %423 = vmatpush.bf16.msra.mxu0 0
      %424 = vmatpush.bf16.msra.mxu0 0
      %425 = vmatpush.bf16.msra.mxu0 %v417
      %426 = vmatpush.bf16.msra.mxu0 %v378
      %427 = vmatmul.bf16.gmra.mxu0 %v411
      %v428 = vpop.f32.mrf.mxu0
      %v429 = vadd.f32 %v389, %v428
      %v430 = vpop.f32.mrf.mxu0
      %v431 = vadd.f32 %v394, %v430
      %432 = vmatmul.bf16.gmra.mxu0 %v414
      %v433 = vpop.f32.mrf.mxu0
      %v434 = vadd.f32 %v399, %v433
      %v435 = vpop.f32.mrf.mxu0
      %436 = vdwg.mxu0
      %v437 = vmax.f32 %v429, 0.0
      %v438 = vmax.f32 %v431, 0.0
      %v439 = vmax.f32 %v434, 0.0
      %v440 = vpack.c.bf16 %v438, %v437
      %v441 = vpack.c.bf16 %v439, %v439
      %v442 = vld [vmem:[%s3] sm:$0xf]
      %v443 = vld [vmem:[%s3 + $0x4] sm:$0xf]
      %v444 = vld [vmem:[%s3 + $0x8] sm:$0xf]
      %v445 = vld [vmem:[%s5 + $0x30] sm:$0xff]
      %v446 = vld [vmem:[%s5 + $0x38] sm:$0xff]
      %v447 = vld [vmem:[%s5 + $0x40] sm:$0xff]
      %449 = vset.pattern.permute.xlu0 0
      %450 = vperm.xlu0 %449, %v445
      %v451 = vpop.permute.xlu0 %450
      %454 = vset.pattern.permute.xlu0 0
      %455 = vperm.xlu0 %454, %v446
      %v456 = vpop.permute.xlu0 %455
      %459 = vset.pattern.permute.xlu0 0
      %460 = vperm.xlu0 %459, %v447
      %v461 = vpop.permute.xlu0 %460
      %v466 = vunpack.c.l.b16 %v442
      %v467 = vunpack.c.l.b16 %v443
      %v468 = vunpack.c.l.b16 %v444
      %v469 = vpack.c.b16 %v467, %v466
      %v470 = vpack.c.b16 %v468, %v468
      %v472 = vsel %vm409, %v469, 0
      %v475 = vsel %vm409, %v470, 0
      %v478 = vsel %vm353, %v441, 0
      %480 = vmatpush.bf16.msra.mxu0 0
      %481 = vmatpush.bf16.msra.mxu0 0
      %482 = vmatpush.bf16.msra.mxu0 0
      %483 = vmatpush.bf16.msra.mxu0 0
      %484 = vmatpush.bf16.msra.mxu0 0
      %485 = vmatpush.bf16.msra.mxu0 0
      %486 = vmatpush.bf16.msra.mxu0 %v478
      %487 = vmatpush.bf16.msra.mxu0 %v440
      %488 = vmatmul.bf16.gmra.mxu0 %v472
      %v489 = vpop.f32.mrf.mxu0
      %v490 = vadd.f32 %v451, %v489
      %v491 = vpop.f32.mrf.mxu0
      %v492 = vadd.f32 %v456, %v491
      %493 = vmatmul.bf16.gmra.mxu0 %v475
      %v494 = vpop.f32.mrf.mxu0
      %v495 = vadd.f32 %v461, %v494
      %v496 = vpop.f32.mrf.mxu0
      %497 = vdwg.mxu0
      %v498 = vmax.f32 %v490, 0.0
      %v499 = vmax.f32 %v492, 0.0
      %v500 = vmax.f32 %v495, 0.0
      %v501 = vpack.c.bf16 %v499, %v498
      %v502 = vpack.c.bf16 %v500, %v500
      %v503 = vld [vmem:[%s4] sm:$0xf]
      %v504 = vld [vmem:[%s5 + $0x48] sm:$0xff]
      %506 = vset.pattern.permute.xlu0 0
      %507 = vperm.xlu0 %506, %v504
      %v508 = vpop.permute.xlu0 %507
      %v511 = vsel %vm409, %v503, 0
      %v514 = vsel %vm353, %v502, 0
      %516 = vmatpush.bf16.msra.mxu0 0
      %517 = vmatpush.bf16.msra.mxu0 0
      %518 = vmatpush.bf16.msra.mxu0 0
      %519 = vmatpush.bf16.msra.mxu0 0
      %520 = vmatpush.bf16.msra.mxu0 0
      %521 = vmatpush.bf16.msra.mxu0 0
      %522 = vmatpush.bf16.msra.mxu0 %v514
      %523 = vmatpush.bf16.msra.mxu0 %v501
      %524 = vmatmul.bf16.gmra.mxu0 %v511
      %v525 = vpop.f32.mrf.mxu0
      %v526 = vadd.f32 %v508, %v525
      %v527 = vpop.f32.mrf.mxu0
      %528 = vdwg.mxu0
      %v529 = vmax.f32 %v526, 0.0
      %v530 = vld [vmem:[%s303] sm:$0xff]
      %v531 = vadd.f32 %v530, %v529
      %532 = vst [vmem:[%s303] sm:$0xff] %v531
      %v533 = vld [vmem:[%s307] sm:$0xff]
      %v534 = vmul.f32 %v529, %v529
      %v535 = vadd.f32 %v533, %v534
      %536 = vst [vmem:[%s307] sm:$0xff] %v535
      %p537 = scmp.lt.s32.totalorder %s23, 1
      %s538 = scalar_select %p537, %s23, 1
      %s539 = smul.addr %s538, 8
      %s540 = scalar_lea.vmem %s6, %s539
      %p541 = scmp.lt.s32.totalorder %s23, 1
      %s542 = scalar_select %p541, %s23, 1
      %s543 = smul.addr %s542, 8
      %s544 = scalar_lea.vmem %s7, %s543
      // Predicated region
      $region49: #{fc_forward.2} parent=43 // pred_check
        %p545 = pneg %p182
      $region50: #{fc_forward.2} parent=43 // pred_check_branch
        %547 = sbr.rel (%p545) target = $region52
      $region51: #{fc_forward.2} parent=43 // pred_region
        _
      $region52: #{fc_forward.2} parent=43 // pred_fallthru
        _
      // Predicated region
      $region53: #{fc_forward.2} parent=43 // pred_check
        %p548 = pneg %p208
      $region54: #{fc_forward.2} parent=43 // pred_check_branch
        %550 = sbr.rel (%p548) target = $region56
      $region55: #{fc_forward.2} parent=43 // pred_region
        _
      $region56: #{fc_forward.2} parent=43 // pred_fallthru
        _
    $region44: #{fc_forward.2} parent=5 // pred_fallthru
      _
    %p551 = scmp.le.s32.totalorder 2, %s14
    // Predicated region
    $region57: #{fc_forward.2} parent=5 // pred_check
      %p552 = pneg %p551
    $region58: #{fc_forward.2} parent=5 // pred_check_branch
      %554 = sbr.rel (%p552) target = $region60
    $region59: #{fc_forward.2} parent=5 // pred_region
      %s555 = ssub.s32 %s14, 2
      // Predicated region
      $region61: #{fc_forward.2} parent=59 // pred_check
        %p556 = pneg %p188
      $region62: #{fc_forward.2} parent=59 // pred_check_branch
        %558 = sbr.rel (%p556) target = $region64
      $region63: #{fc_forward.2} parent=59 // pred_region
        %p559 = scmp.lt.s32.totalorder %s25, 1
        %s560 = scalar_select %p559, %s25, 1
        %s561 = smul.addr %s560, 8
        %s562 = scalar_lea.vmem %s6, %s561
      $region64: #{fc_forward.2} parent=59 // pred_fallthru
        _
      // Predicated region
      $region65: #{fc_forward.2} parent=59 // pred_check
        %p563 = pneg %p214
      $region66: #{fc_forward.2} parent=59 // pred_check_branch
        %565 = sbr.rel (%p563) target = $region68
      $region67: #{fc_forward.2} parent=59 // pred_region
        %p566 = scmp.lt.s32.totalorder %s25, 1
        %s567 = scalar_select %p566, %s25, 1
        %s568 = smul.addr %s567, 8
        %s569 = scalar_lea.vmem %s7, %s568
      $region68: #{fc_forward.2} parent=59 // pred_fallthru
        _
    $region60: #{fc_forward.2} parent=5 // pred_fallthru
      _
  $region6: #{fc_forward.2} parent=0 // loop_footer
    %s18 = sadd.s32 1, %s14
  $region7: #{fc_forward.2} parent=0 // loop_footer_branch
    %13 = sbr.rel target = $region3
  $region8: #{fc_forward.2} parent=0 // loop_exit
    _

// kernel: fc_forward.3
$region0: #{fc_forward.3}
  #allocation0 [shape = 'u32[]', space=smem, size = 0x4, offset = 0x4, fixed_abs, tag = 'smem constant byte address 0x4 - core index']
  #allocation1 [shape = 'u32[72,128]{1,0:T(1,128)}', space=vmem, size = 0x9000, scoped, tag = 'internal scratch']
  %s0 = inlined_call_operand.vmem [shape: f32[2,8,128], index: 0, kind: input, shape index: {}]
  %s1 = inlined_call_operand.vmem [shape: bf16[24,8], index: 1, kind: input, shape index: {}]
  %s2 = inlined_call_operand.vmem [shape: bf16[24,24], index: 2, kind: input, shape index: {}]
  %s3 = inlined_call_operand.vmem [shape: bf16[24,24], index: 3, kind: input, shape index: {}]
  %s4 = inlined_call_operand.vmem [shape: bf16[8,24], index: 4, kind: input, shape index: {}]
  %s5 = inlined_call_operand.vmem [shape: f32[96,1], index: 5, kind: input, shape index: {}]
  %s6 = inlined_call_operand.vmem [shape: f32[2,8,128], index: 6, kind: output, shape index: {}]
  %s7 = sld [smem:[#allocation0]]
  $region57: #{fc_forward.3} parent=0
    _
  %s9 = ssub.s32 1, %s7
  %s10 = scalar_select 0, %s9, %s7
  loop: start=0, step=1, limit=4
  $region2: #{fc_forward.3} parent=0 // loop_pre_header
    _
  $region3: #{fc_forward.3} parent=0 // loop_header
    %s12 = sphi 0, %s16
    %p13 = scmp.ge.s32.totalorder %s12, 4
    %s19 = sphi 0, %s31
    %s20 = sphi 0, %s27
    %s21 = sphi 0, %s19
    %s22 = sphi 0, %s20
    %s23 = sphi 0, %s21
    %s24 = sphi 0, %s22
    %s36 = sphi 0, %s38
    %s39 = sphi 0, %s36
    %s40 = sphi 0, %s39
    %s56 = sphi 0, %s40
    %s60 = sphi 0, %s60
    %s62 = sphi 0, %s60
    %s63 = sphi 0, %s62
    %s77 = sphi 0, %s63
    %s81 = sphi 0, %s81
    %s83 = sphi 0, %s81
    %s84 = sphi 0, %s83
    %s98 = sphi 0, %s84
    %s102 = sphi 0, %s102
    %s104 = sphi 0, %s102
    %s105 = sphi 0, %s104
    %s119 = sphi 0, %s105
    %s123 = sphi 0, %s123
    %s125 = sphi 0, %s123
    %s126 = sphi 0, %s125
    %s140 = sphi 0, %s126
    %s144 = sphi 0, %s144
    %s146 = sphi 0, %s144
    %s147 = sphi 0, %s146
    %s161 = sphi 0, %s147
    %s169 = sphi 0, %s171
    %s172 = sphi 0, %s169
    %s173 = sphi 0, %s172
    %s189 = sphi 0, %s173
  $region4: #{fc_forward.3} parent=0 // loop_header_branch
    %15 = sbr.rel (%p13) target = $region8
  $region5: #{fc_forward.3} parent=0 // loop_body
    %s17 = ssub.s32 %s12, 1
    %s18 = ssub.s32 %s12, 2
    %s25 = sadd.s32 1, %s20
    %p26 = scmp.ge.s32.totalorder %s25, 1
    %s27 = scalar_select %p26, 0, %s25
    %s28 = sadd.s32 1, %s19
    %s29 = scalar_select %p26, %s28, %s19
    %p30 = scmp.ge.s32.totalorder %s29, 2
    %s31 = scalar_select %p30, 0, %s29
    %s32 = ssub.s32 %s19, %s31
    %s33 = ssub.s32 %s20, %s27
    %s34 = sor.u32 %s32, %s33
    %p35 = scmp.eq.s32.totalorder %s34, 0
    %s37 = sadd.s32 %s36, 1
    %s38 = scalar_select %p35, %s36, %s37
    %p41 = pneg %p35
    %p42 = scmp.eq.s32.totalorder %s12, 1
    %p43 = por %p41, %p42
    %p44 = scmp.ne.s32.totalorder %s36, %s39
    %p45 = scmp.eq.s32.totalorder %s12, 0
    %p46 = por %p44, %p45
    %p47 = scmp.ne.s32.totalorder %s36, %s39
    %p48 = scmp.eq.s32.totalorder %s17, 1
    %p49 = por %p47, %p48
    %p50 = scmp.ne.s32.totalorder %s39, %s40
    %p51 = scmp.eq.s32.totalorder %s17, 0
    %p52 = por %p50, %p51
    %p53 = scmp.ne.s32.totalorder %s39, %s40
    %p54 = scmp.eq.s32.totalorder %s18, 1
    %p55 = por %p53, %p54
    %p57 = scmp.ne.s32.totalorder %s40, %s56
    %p58 = scmp.eq.s32.totalorder %s18, 0
    %p59 = por %p57, %p58
    %s61 = sadd.s32 %s60, 1
    %p64 = scmp.eq.s32.totalorder %s12, 1
    %p65 = scmp.ne.s32.totalorder %s60, %s62
    %p66 = scmp.eq.s32.totalorder %s12, 0
    %p67 = por %p65, %p66
    %p68 = scmp.ne.s32.totalorder %s60, %s62
    %p69 = scmp.eq.s32.totalorder %s17, 1
    %p70 = por %p68, %p69
    %p71 = scmp.ne.s32.totalorder %s62, %s63
    %p72 = scmp.eq.s32.totalorder %s17, 0
    %p73 = por %p71, %p72
    %p74 = scmp.ne.s32.totalorder %s62, %s63
    %p75 = scmp.eq.s32.totalorder %s18, 1
    %p76 = por %p74, %p75
    %p78 = scmp.ne.s32.totalorder %s63, %s77
    %p79 = scmp.eq.s32.totalorder %s18, 0
    %p80 = por %p78, %p79
    %s82 = sadd.s32 %s81, 1
    %p85 = scmp.eq.s32.totalorder %s12, 1
    %p86 = scmp.ne.s32.totalorder %s81, %s83
    %p87 = scmp.eq.s32.totalorder %s12, 0
    %p88 = por %p86, %p87
    %p89 = scmp.ne.s32.totalorder %s81, %s83
    %p90 = scmp.eq.s32.totalorder %s17, 1
    %p91 = por %p89, %p90
    %p92 = scmp.ne.s32.totalorder %s83, %s84
    %p93 = scmp.eq.s32.totalorder %s17, 0
    %p94 = por %p92, %p93
    %p95 = scmp.ne.s32.totalorder %s83, %s84
    %p96 = scmp.eq.s32.totalorder %s18, 1
    %p97 = por %p95, %p96
    %p99 = scmp.ne.s32.totalorder %s84, %s98
    %p100 = scmp.eq.s32.totalorder %s18, 0
    %p101 = por %p99, %p100
    %s103 = sadd.s32 %s102, 1
    %p106 = scmp.eq.s32.totalorder %s12, 1
    %p107 = scmp.ne.s32.totalorder %s102, %s104
    %p108 = scmp.eq.s32.totalorder %s12, 0
    %p109 = por %p107, %p108
    %p110 = scmp.ne.s32.totalorder %s102, %s104
    %p111 = scmp.eq.s32.totalorder %s17, 1
    %p112 = por %p110, %p111
    %p113 = scmp.ne.s32.totalorder %s104, %s105
    %p114 = scmp.eq.s32.totalorder %s17, 0
    %p115 = por %p113, %p114
    %p116 = scmp.ne.s32.totalorder %s104, %s105
    %p117 = scmp.eq.s32.totalorder %s18, 1
    %p118 = por %p116, %p117
    %p120 = scmp.ne.s32.totalorder %s105, %s119
    %p121 = scmp.eq.s32.totalorder %s18, 0
    %p122 = por %p120, %p121
    %s124 = sadd.s32 %s123, 1
    %p127 = scmp.eq.s32.totalorder %s12, 1
    %p128 = scmp.ne.s32.totalorder %s123, %s125
    %p129 = scmp.eq.s32.totalorder %s12, 0
    %p130 = por %p128, %p129
    %p131 = scmp.ne.s32.totalorder %s123, %s125
    %p132 = scmp.eq.s32.totalorder %s17, 1
    %p133 = por %p131, %p132
    %p134 = scmp.ne.s32.totalorder %s125, %s126
    %p135 = scmp.eq.s32.totalorder %s17, 0
    %p136 = por %p134, %p135
    %p137 = scmp.ne.s32.totalorder %s125, %s126
    %p138 = scmp.eq.s32.totalorder %s18, 1
    %p139 = por %p137, %p138
    %p141 = scmp.ne.s32.totalorder %s126, %s140
    %p142 = scmp.eq.s32.totalorder %s18, 0
    %p143 = por %p141, %p142
    %s145 = sadd.s32 %s144, 1
    %p148 = scmp.eq.s32.totalorder %s12, 1
    %p149 = scmp.ne.s32.totalorder %s144, %s146
    %p150 = scmp.eq.s32.totalorder %s12, 0
    %p151 = por %p149, %p150
    %p152 = scmp.ne.s32.totalorder %s144, %s146
    %p153 = scmp.eq.s32.totalorder %s17, 1
    %p154 = por %p152, %p153
    %p155 = scmp.ne.s32.totalorder %s146, %s147
    %p156 = scmp.eq.s32.totalorder %s17, 0
    %p157 = por %p155, %p156
    %p158 = scmp.ne.s32.totalorder %s146, %s147
    %p159 = scmp.eq.s32.totalorder %s18, 1
    %p160 = por %p158, %p159
    %p162 = scmp.ne.s32.totalorder %s147, %s161
    %p163 = scmp.eq.s32.totalorder %s18, 0
    %p164 = por %p162, %p163
    %s165 = ssub.s32 %s19, %s31
    %s166 = ssub.s32 %s20, %s27
    %s167 = sor.u32 %s165, %s166
    %p168 = scmp.eq.s32.totalorder %s167, 0
    %s170 = sadd.s32 %s169, 1
    %s171 = scalar_select %p168, %s169, %s170
    %p174 = pneg %p168
    %p175 = scmp.eq.s32.totalorder %s12, 1
    %p176 = por %p174, %p175
    %p177 = scmp.ne.s32.totalorder %s169, %s172
    %p178 = scmp.eq.s32.totalorder %s12, 0
    %p179 = por %p177, %p178
    %p180 = scmp.ne.s32.totalorder %s169, %s172
    %p181 = scmp.eq.s32.totalorder %s17, 1
    %p182 = por %p180, %p181
    %p183 = scmp.ne.s32.totalorder %s172, %s173
    %p184 = scmp.eq.s32.totalorder %s17, 0
    %p185 = por %p183, %p184
    %p186 = scmp.ne.s32.totalorder %s172, %s173
    %p187 = scmp.eq.s32.totalorder %s18, 1
    %p188 = por %p186, %p187
    %p190 = scmp.ne.s32.totalorder %s173, %s189
    %p191 = scmp.eq.s32.totalorder %s18, 0
    %p192 = por %p190, %p191
    %p193 = scmp.le.s32.totalorder 1, %s12
    %p194 = scmp.lt.s32.totalorder %s12, 3
    %p195 = pnand %p193, %p194
    %p196 = pneg %p195
    // Predicated region
    $region9: #{fc_forward.3} parent=5 // pred_check
      _
    $region10: #{fc_forward.3} parent=5 // pred_check_branch
      %198 = sbr.rel (%p195) target = $region12
    $region11: #{fc_forward.3} parent=5 // pred_region
      %s199 = ssub.s32 %s12, 1
      // Predicated region
      $region13: #{fc_forward.3} parent=11 // pred_check
        %p200 = pneg %p73
      $region14: #{fc_forward.3} parent=11 // pred_check_branch
        %202 = sbr.rel (%p200) target = $region16
      $region15: #{fc_forward.3} parent=11 // pred_region
        _
      $region16: #{fc_forward.3} parent=11 // pred_fallthru
        _
      // Predicated region
      $region17: #{fc_forward.3} parent=11 // pred_check
        %p203 = pneg %p94
      $region18: #{fc_forward.3} parent=11 // pred_check_branch
        %205 = sbr.rel (%p203) target = $region20
      $region19: #{fc_forward.3} parent=11 // pred_region
        _
      $region20: #{fc_forward.3} parent=11 // pred_fallthru
        _
      // Predicated region
      $region21: #{fc_forward.3} parent=11 // pred_check
        %p206 = pneg %p115
      $region22: #{fc_forward.3} parent=11 // pred_check_branch
        %208 = sbr.rel (%p206) target = $region24
      $region23: #{fc_forward.3} parent=11 // pred_region
        _
      $region24: #{fc_forward.3} parent=11 // pred_fallthru
        _
      // Predicated region
      $region25: #{fc_forward.3} parent=11 // pred_check
        %p209 = pneg %p136
      $region26: #{fc_forward.3} parent=11 // pred_check_branch
        %211 = sbr.rel (%p209) target = $region28
      $region27: #{fc_forward.3} parent=11 // pred_region
        _
      $region28: #{fc_forward.3} parent=11 // pred_fallthru
        _
      // Predicated region
      $region29: #{fc_forward.3} parent=11 // pred_check
        %p212 = pneg %p157
      $region30: #{fc_forward.3} parent=11 // pred_check_branch
        %214 = sbr.rel (%p212) target = $region32
      $region31: #{fc_forward.3} parent=11 // pred_region
        _
      $region32: #{fc_forward.3} parent=11 // pred_fallthru
        _
    $region12: #{fc_forward.3} parent=5 // pred_fallthru
      _
    %p215 = scmp.lt.s32.totalorder %s12, 2
    // Predicated region
    $region33: #{fc_forward.3} parent=5 // pred_check
      %p216 = pneg %p215
    $region34: #{fc_forward.3} parent=5 // pred_check_branch
      %218 = sbr.rel (%p216) target = $region36
    $region35: #{fc_forward.3} parent=5 // pred_region
      // Predicated region
      $region37: #{fc_forward.3} parent=35 // pred_check
        %p219 = pneg %p46
      $region38: #{fc_forward.3} parent=35 // pred_check_branch
        %221 = sbr.rel (%p219) target = $region40
      $region39: #{fc_forward.3} parent=35 // pred_region
        %p222 = scmp.lt.s32.totalorder %s19, 1
        %s223 = scalar_select %p222, %s19, 1
        %p224 = scmp.lt.s32.totalorder %s20, 0
        %s225 = scalar_select %p224, %s20, 0
        %s226 = sadd.s32 %s225, %s223
        %s227 = smul.addr %s226, 8
        %s228 = scalar_lea.vmem %s0, %s227
      $region40: #{fc_forward.3} parent=35 // pred_fallthru
        _
    $region36: #{fc_forward.3} parent=5 // pred_fallthru
      _
    %p229 = scmp.le.s32.totalorder 1, %s12
    %p230 = scmp.lt.s32.totalorder %s12, 3
    %p231 = pnand %p229, %p230
    %p232 = pneg %p231
    // Predicated region
    $region41: #{fc_forward.3} parent=5 // pred_check
      _
    $region42: #{fc_forward.3} parent=5 // pred_check_branch
      %234 = sbr.rel (%p231) target = $region44
    $region43: #{fc_forward.3} parent=5 // pred_region
      %s235 = ssub.s32 %s12, 1
      %p236 = scmp.lt.s32.totalorder %s21, 1
      %s237 = scalar_select %p236, %s21, 1
      %p238 = scmp.lt.s32.totalorder %s22, 0
      %s239 = scalar_select %p238, %s22, 0
      %s240 = sadd.s32 %s239, %s237
      %s241 = smul.addr %s240, 8
      %s242 = scalar_lea.vmem %s0, %s241
      %p243 = pneg %p52
      %p244 = pneg %p49
      %p245 = pneg %p73
      %p246 = pneg %p70
      %p247 = pneg %p94
      %p248 = pneg %p91
      %p249 = pneg %p115
      %p250 = pneg %p112
      %p251 = pneg %p136
      %p252 = pneg %p133
      %p253 = pneg %p157
      %p254 = pneg %p154
      %p255 = pneg %p185
      %p256 = pneg %p182
      %p257 = scmp.lt.s32.totalorder %s21, 1
      %s258 = scalar_select %p257, %s21, 1
      %p259 = scmp.lt.s32.totalorder %s22, 0
      %s260 = scalar_select %p259, %s22, 0
      %s261 = sadd.s32 %s260, %s258
      %s262 = smul.addr %s261, 8
      %s263 = scalar_lea.vmem %s6, %s262
      %p264 = scmp.lt.s32.totalorder %s21, 1
      %s265 = scalar_select %p264, %s21, 1
      %p266 = scmp.lt.s32.totalorder %s22, 0
      %s267 = scalar_select %p266, %s22, 0
      %s268 = sadd.s32 %s267, %s265
      %s269 = smul.addr %s268, 8
      %s270 = scalar_lea.vmem %s0, %s269
      %p271 = scmp.lt.s32.totalorder %s21, 1
      %s272 = scalar_select %p271, %s21, 1
      %p273 = scmp.lt.s32.totalorder %s22, 0
      %s274 = scalar_select %p273, %s22, 0
      %s275 = sadd.s32 %s274, %s272
      %s276 = smul.addr %s275, 8
      %s277 = scalar_lea.vmem %s6, %s276
      %v279 = vld [vmem:[%s270] sm:$0xff]
      %v280 = vpack.c.bf16 %v279, %v279
      %v281 = vld [vmem:[%s1] sm:$0xf]
      %v282 = vld [vmem:[%s1 + $0x4] sm:$0xf]
      %v283 = vld [vmem:[%s1 + $0x8] sm:$0xf]
      %v284 = vld [vmem:[%s5] sm:$0xff]
      %v285 = vld [vmem:[%s5 + $0x8] sm:$0xff]
      %v286 = vld [vmem:[%s5 + $0x10] sm:$0xff]
      %288 = vset.pattern.permute.xlu0 0
      %289 = vperm.xlu0 %288, %v284
      %v290 = vpop.permute.xlu0 %289
      %293 = vset.pattern.permute.xlu0 0
      %294 = vperm.xlu0 %293, %v285
      %v295 = vpop.permute.xlu0 %294
      %298 = vset.pattern.permute.xlu0 0
      %299 = vperm.xlu0 %298, %v286
      %v300 = vpop.permute.xlu0 %299
      %v305 = vunpack.c.l.b16 %v281
      %v306 = vunpack.c.l.b16 %v282
      %v307 = vunpack.c.l.b16 %v283
      %v308 = vpack.c.b16 %v306, %v305
      %v309 = vpack.c.b16 %v307, %v307
      %vm310 = vcmask 64512
      %v312 = vsel %vm310, %v308, 0
      %v315 = vsel %vm310, %v309, 0
      %vm317 = vcmask 1043456
      %v319 = vsel %vm317, %v280, 0
      %321 = vmatpush.bf16.msra.mxu0 0
      %322 = vmatpush.bf16.msra.mxu0 0
      %323 = vmatpush.bf16.msra.mxu0 0
      %324 = vmatpush.bf16.msra.mxu0 0
      %325 = vmatpush.bf16.msra.mxu0 0
      %326 = vmatpush.bf16.msra.mxu0 0
      %327 = vmatpush.bf16.msra.mxu0 0
      %328 = vmatpush.bf16.msra.mxu0 %v319
      %329 = vmatmul.bf16.gmra.mxu0 %v312
      %v330 = vpop.f32.mrf.mxu0
      %v331 = vadd.f32 %v290, %v330
      %v332 = vpop.f32.mrf.mxu0
      %v333 = vadd.f32 %v295, %v332
      %334 = vmatmul.bf16.gmra.mxu0 %v315
      %v335 = vpop.f32.mrf.mxu0
      %v336 = vadd.f32 %v300, %v335
      %v337 = vpop.f32.mrf.mxu0
      %338 = vdwg.mxu0
      %v339 = vmax.f32 %v331, 0.0
      %v340 = vmax.f32 %v333, 0.0
      %v341 = vmax.f32 %v336, 0.0
      %v342 = vpack.c.bf16 %v340, %v339
      %v343 = vpack.c.bf16 %v341, %v341
      %v344 = vld [vmem:[%s2] sm:$0xf]
      %v345 = vld [vmem:[%s2 + $0x4] sm:$0xf]
      %v346 = vld [vmem:[%s2 + $0x8] sm:$0xf]
      %v347 = vld [vmem:[%s5 + $0x18] sm:$0xff]
      %v348 = vld [vmem:[%s5 + $0x20] sm:$0xff]
      %v349 = vld [vmem:[%s5 + $0x28] sm:$0xff]
      %351 = vset.pattern.permute.xlu0 0
      %352 = vperm.xlu0 %351, %v347
      %v353 = vpop.permute.xlu0 %352
      %356 = vset.pattern.permute.xlu0 0
      %357 = vperm.xlu0 %356, %v348
      %v358 = vpop.permute.xlu0 %357
      %361 = vset.pattern.permute.xlu0 0
      %362 = vperm.xlu0 %361, %v349
      %v363 = vpop.permute.xlu0 %362
      %v368 = vunpack.c.l.b16 %v344
      %v369 = vunpack.c.l.b16 %v345
      %v370 = vunpack.c.l.b16 %v346
      %v371 = vpack.c.b16 %v369, %v368
      %v372 = vpack.c.b16 %v370, %v370
      %vm373 = vcmask 195584
      %v375 = vsel %vm373, %v371, 0
      %v378 = vsel %vm373, %v372, 0
      %v381 = vsel %vm317, %v343, 0
      %383 = vmatpush.bf16.msra.mxu0 0
      %384 = vmatpush.bf16.msra.mxu0 0
      %385 = vmatpush.bf16.msra.mxu0 0
      %386 = vmatpush.bf16.msra.mxu0 0
      %387 = vmatpush.bf16.msra.mxu0 0
      %388 = vmatpush.bf16.msra.mxu0 0
      %389 = vmatpush.bf16.msra.mxu0 %v381
      %390 = vmatpush.bf16.msra.mxu0 %v342
      %391 = vmatmul.bf16.gmra.mxu0 %v375
      %v392 = vpop.f32.mrf.mxu0
      %v393 = vadd.f32 %v353, %v392
      %v394 = vpop.f32.mrf.mxu0
      %v395 = vadd.f32 %v358, %v394
      %396 = vmatmul.bf16.gmra.mxu0 %v378
      %v397 = vpop.f32.mrf.mxu0
      %v398 = vadd.f32 %v363, %v397
      %v399 = vpop.f32.mrf.mxu0
      %400 = vdwg.mxu0
      %v401 = vmax.f32 %v393, 0.0
      %v402 = vmax.f32 %v395, 0.0
      %v403 = vmax.f32 %v398, 0.0
      %v404 = vpack.c.bf16 %v402, %v401
      %v405 = vpack.c.bf16 %v403, %v403
      %v406 = vld [vmem:[%s3] sm:$0xf]
      %v407 = vld [vmem:[%s3 + $0x4] sm:$0xf]
      %v408 = vld [vmem:[%s3 + $0x8] sm:$0xf]
      %v409 = vld [vmem:[%s5 + $0x30] sm:$0xff]
      %v410 = vld [vmem:[%s5 + $0x38] sm:$0xff]
      %v411 = vld [vmem:[%s5 + $0x40] sm:$0xff]
      %413 = vset.pattern.permute.xlu0 0
      %414 = vperm.xlu0 %413, %v409
      %v415 = vpop.permute.xlu0 %414
      %418 = vset.pattern.permute.xlu0 0
      %419 = vperm.xlu0 %418, %v410
      %v420 = vpop.permute.xlu0 %419
      %423 = vset.pattern.permute.xlu0 0
      %424 = vperm.xlu0 %423, %v411
      %v425 = vpop.permute.xlu0 %424
      %v430 = vunpack.c.l.b16 %v406
      %v431 = vunpack.c.l.b16 %v407
      %v432 = vunpack.c.l.b16 %v408
      %v433 = vpack.c.b16 %v431, %v430
      %v434 = vpack.c.b16 %v432, %v432
      %v436 = vsel %vm373, %v433, 0
      %v439 = vsel %vm373, %v434, 0
      %v442 = vsel %vm317, %v405, 0
      %444 = vmatpush.bf16.msra.mxu0 0
      %445 = vmatpush.bf16.msra.mxu0 0
      %446 = vmatpush.bf16.msra.mxu0 0
      %447 = vmatpush.bf16.msra.mxu0 0
      %448 = vmatpush.bf16.msra.mxu0 0
      %449 = vmatpush.bf16.msra.mxu0 0
      %450 = vmatpush.bf16.msra.mxu0 %v442
      %451 = vmatpush.bf16.msra.mxu0 %v404
      %452 = vmatmul.bf16.gmra.mxu0 %v436
      %v453 = vpop.f32.mrf.mxu0
      %v454 = vadd.f32 %v415, %v453
      %v455 = vpop.f32.mrf.mxu0
      %v456 = vadd.f32 %v420, %v455
      %457 = vmatmul.bf16.gmra.mxu0 %v439
      %v458 = vpop.f32.mrf.mxu0
      %v459 = vadd.f32 %v425, %v458
      %v460 = vpop.f32.mrf.mxu0
      %461 = vdwg.mxu0
      %v462 = vmax.f32 %v454, 0.0
      %v463 = vmax.f32 %v456, 0.0
      %v464 = vmax.f32 %v459, 0.0
      %v465 = vpack.c.bf16 %v463, %v462
      %v466 = vpack.c.bf16 %v464, %v464
      %v467 = vld [vmem:[%s4] sm:$0xf]
      %v468 = vld [vmem:[%s5 + $0x48] sm:$0xff]
      %470 = vset.pattern.permute.xlu0 0
      %471 = vperm.xlu0 %470, %v468
      %v472 = vpop.permute.xlu0 %471
      %v475 = vsel %vm373, %v467, 0
      %v478 = vsel %vm317, %v466, 0
      %480 = vmatpush.bf16.msra.mxu0 0
      %481 = vmatpush.bf16.msra.mxu0 0
      %482 = vmatpush.bf16.msra.mxu0 0
      %483 = vmatpush.bf16.msra.mxu0 0
      %484 = vmatpush.bf16.msra.mxu0 0
      %485 = vmatpush.bf16.msra.mxu0 0
      %486 = vmatpush.bf16.msra.mxu0 %v478
      %487 = vmatpush.bf16.msra.mxu0 %v465
      %488 = vmatmul.bf16.gmra.mxu0 %v475
      %v489 = vpop.f32.mrf.mxu0
      %v490 = vadd.f32 %v472, %v489
      %v491 = vpop.f32.mrf.mxu0
      %492 = vdwg.mxu0
      %v493 = vmax.f32 %v490, 0.0
      %v494 = vld [vmem:[%s5 + $0x50] sm:$0xff]
      %496 = vset.pattern.permute.xlu0 0
      %497 = vperm.xlu0 %496, %v494
      %v498 = vpop.permute.xlu0 %497
      %v500 = vmul.f32 %v493, %v498
      %v501 = vld [vmem:[%s5 + $0x58] sm:$0xff]
      %503 = vset.pattern.permute.xlu0 0
      %504 = vperm.xlu0 %503, %v501
      %v505 = vpop.permute.xlu0 %504
      %v507 = vadd.f32 %v500, %v505
      %v508 = vmax.f32 %v507, 0.0
      %509 = vst [vmem:[%s277] sm:$0xff] %v508
      %p510 = scmp.lt.s32.totalorder %s21, 1
      %s511 = scalar_select %p510, %s21, 1
      %p512 = scmp.lt.s32.totalorder %s22, 0
      %s513 = scalar_select %p512, %s22, 0
      %s514 = sadd.s32 %s513, %s511
      %s515 = smul.addr %s514, 8
      %s516 = scalar_lea.vmem %s6, %s515
      // Predicated region
      $region45: #{fc_forward.3} parent=43 // pred_check
        %p517 = pneg %p182
      $region46: #{fc_forward.3} parent=43 // pred_check_branch
        %519 = sbr.rel (%p517) target = $region48
      $region47: #{fc_forward.3} parent=43 // pred_region
        _
      $region48: #{fc_forward.3} parent=43 // pred_fallthru
        _
    $region44: #{fc_forward.3} parent=5 // pred_fallthru
      _
    %p520 = scmp.le.s32.totalorder 2, %s12
    // Predicated region
    $region49: #{fc_forward.3} parent=5 // pred_check
      %p521 = pneg %p520
    $region50: #{fc_forward.3} parent=5 // pred_check_branch
      %523 = sbr.rel (%p521) target = $region52
    $region51: #{fc_forward.3} parent=5 // pred_region
      %s524 = ssub.s32 %s12, 2
      // Predicated region
      $region53: #{fc_forward.3} parent=51 // pred_check
        %p525 = pneg %p188
      $region54: #{fc_forward.3} parent=51 // pred_check_branch
        %527 = sbr.rel (%p525) target = $region56
      $region55: #{fc_forward.3} parent=51 // pred_region
        %p528 = scmp.lt.s32.totalorder %s23, 1
        %s529 = scalar_select %p528, %s23, 1
        %p530 = scmp.lt.s32.totalorder %s24, 0
        %s531 = scalar_select %p530, %s24, 0
        %s532 = sadd.s32 %s531, %s529
        %s533 = smul.addr %s532, 8
        %s534 = scalar_lea.vmem %s6, %s533
      $region56: #{fc_forward.3} parent=51 // pred_fallthru
        _
    $region52: #{fc_forward.3} parent=5 // pred_fallthru
      _
  $region6: #{fc_forward.3} parent=0 // loop_footer
    %s16 = sadd.s32 1, %s12
  $region7: #{fc_forward.3} parent=0 // loop_footer_branch
    %11 = sbr.rel target = $region3
  $region8: #{fc_forward.3} parent=0 // loop_exit
    _

</llo_original>
